<compile_context>
chip_gen: v5e
topology: v5e:2x2
jax: 0.10.0
libtpu: 0.0.40
codegen_flags: <defaults>
</compile_context>

<pallas_src>
import math

import jax
import jax.numpy as jnp
from jax.experimental import pallas as pl
from jax.experimental.pallas import tpu as pltpu


_VMEM_LIMIT_BYTES = 32 * 1024 * 1024   # explicit scoped-VMEM limit (all gens)
_MAX_TILE_ROWS = 32768                 # cap on logical batch rows per grid step


# ---------------------------------------------------------------------------
# Kernel: one grid step = one lane-packed batch tile.
#   x_ref : [rows, P*n_in]   (input dtype, e.g. f32)   -- streamed
#   w1_ref: [P*n_in, P*H]    (MXU dtype, block-diag)   -- VMEM resident
#   b1_ref: [1, P*H]         (f32, P-fold tiled)       -- VMEM resident
#   w2_ref: [P*H, P*O]       (MXU dtype, block-diag)   -- VMEM resident
#   b2_ref: [1, P*O]         (f32, P-fold tiled)       -- VMEM resident
#   o_ref : [rows, P*O]      (output dtype)            -- streamed
# ---------------------------------------------------------------------------
def wnet_kernel(x_ref, w1_ref, b1_ref, w2_ref, b2_ref, o_ref):
    # hidden = relu(x @ W1 + b1): cast to the MXU dtype only at the dot
    # boundary; accumulate and do all elementwise math in f32.
    x = x_ref[...].astype(w1_ref.dtype)
    h = jnp.dot(x, w1_ref[...], preferred_element_type=jnp.float32)
    h = jnp.maximum(h + b1_ref[...], 0.0)
    # out = sigmoid(h @ W2 + b2)
    h = h.astype(w2_ref.dtype)
    z = jnp.dot(h, w2_ref[...], preferred_element_type=jnp.float32)
    z = z + b2_ref[...]
    o_ref[...] = jax.nn.sigmoid(z).astype(o_ref.dtype)


# ---------------------------------------------------------------------------
# Helpers
# ---------------------------------------------------------------------------
def _round_up(n, m):
    return ((n + m - 1) // m) * m


def _tile_bytes(rows, cols, dtype):
    """VMEM bytes of a [rows, cols] tile including (8,128) layout padding."""
    r = _round_up(max(int(rows), 1), 8)
    c = _round_up(max(int(cols), 1), 128)
    return r * c * jnp.dtype(dtype).itemsize


def _pick_packing(n_in, n_hidden, n_out, mm_bytes, max_weight_bytes=8 << 20):
    """Fold P batch rows per packed row so P*n_out is (ideally) a multiple of
    128 lanes, while keeping the P-fold block-diagonal weights small."""
    p = 128 // math.gcd(128, n_out)
    if p > 32:                      # awkward n_out: settle for "dense enough"
        p = 16
    while p > 1 and (p * p * (n_in * n_hidden + n_hidden * n_out) * mm_bytes
                     > max_weight_bytes):
        p //= 2
    return max(p, 1)


def _block_diag(w, p):
    """[a, b] -> [p*a, p*b] block-diagonal with p copies of w (exact)."""
    if p == 1:
        return w
    a, b = w.shape
    eye = jnp.eye(p, dtype=w.dtype)
    return (eye[:, None, :, None] * w[None, :, None, :]).reshape(p * a, p * b)


def _pick_batch_tile(n_in, n_hidden, n_out, p, x_dtype, mm_dtype, out_dtype,
                     budget_bytes):
    """Largest logical-batch tile whose lane-padding-aware VMEM footprint
    (double-buffered streamed tiles + in-kernel intermediates + resident
    weights) fits `budget_bytes`.  Multiple of 16*p, capped at _MAX_TILE_ROWS."""
    fixed = (2 * _tile_bytes(p * n_in, p * n_hidden, mm_dtype)      # W1 (resident)
             + 2 * _tile_bytes(p * n_hidden, p * n_out, mm_dtype)   # W2 (resident)
             + 2 * _tile_bytes(1, p * n_hidden, jnp.float32)        # b1
             + 2 * _tile_bytes(1, p * n_out, jnp.float32))          # b2
    per8 = (2 * _tile_bytes(8, p * n_in, x_dtype)             # x tile, dbuf
            + 2 * _tile_bytes(8, p * n_out, out_dtype)        # out tile, dbuf
            + _tile_bytes(8, p * n_in, mm_dtype)              # x cast for dot 1
            + 2 * _tile_bytes(8, p * n_hidden, jnp.float32)   # f32 hidden + transient
            + _tile_bytes(8, p * n_hidden, mm_dtype)          # hidden cast for dot 2
            + _tile_bytes(8, p * n_out, jnp.float32))         # f32 logits
    per_packed_row = max(per8 // 8, 1)
    rows_packed = max((budget_bytes - fixed) // per_packed_row, 1)
    tb = rows_packed * p
    step = 16 * p                        # keep blocks (16,128)-friendly (bf16 out)
    tb = max(step, (tb // step) * step)
    return min(tb, _MAX_TILE_ROWS)


# ---------------------------------------------------------------------------
# Public wrapper
# ---------------------------------------------------------------------------
def wnet_forward(x, w1, b1, w2, b2, *, matmul_dtype=jnp.bfloat16,
                 out_dtype=None, block_b=None):
    """Fused WNet forward: sigmoid(relu(x @ W1 + b1) @ W2 + b2).

    x : [B, n_in] (streamed in its native dtype; cast to MXU dtype in-kernel)
    w1: [n_in, n_hidden], b1: [1, n_hidden] ; w2: [n_hidden, n_out], b2: [1, n_out]
    matmul_dtype: dtype fed to the MXU (bf16 recommended; accumulation is f32)
    out_dtype   : output dtype (default x.dtype; bf16 halves HBM writeback)
    block_b     : optional override for the logical batch-tile size.
    """
    B, n_in = x.shape
    n_hidden, n_out = w1.shape[1], w2.shape[1]
    out_dtype = jnp.dtype(x.dtype if out_dtype is None else out_dtype)
    mm_dtype = jnp.dtype(matmul_dtype)

    p = _pick_packing(n_in, n_hidden, n_out, mm_dtype.itemsize)

    # Pad the batch by at most p-1 rows so the lane-packing reshape divides.
    pB = _round_up(B, p)
    if pB != B:
        x = jnp.pad(x, ((0, pB - B), (0, 0)))
    n_rows = pB // p

    # Lane-pack activations: [pB, n_in] -> [pB/p, p*n_in] is a bit-identical
    # row-major reshape (free metadata) -> the kernel streams lane-dense tiles.
    xp = x.reshape(n_rows, p * n_in)

    # One-time, tiny weight prep: p-fold block-diagonal weights in the MXU
    # dtype, and p-fold tiled biases kept in f32 for the VPU/EUP path.
    w1p = _block_diag(w1.astype(mm_dtype), p)                        # [p*In, p*H]
    w2p = _block_diag(w2.astype(mm_dtype), p)                        # [p*H, p*O]
    b1p = jnp.tile(b1.reshape(1, n_hidden).astype(jnp.float32), (1, p))
    b2p = jnp.tile(b2.reshape(1, n_out).astype(jnp.float32), (1, p))

    if block_b is None:
        tb = _pick_batch_tile(n_in, n_hidden, n_out, p, x.dtype, mm_dtype,
                              out_dtype,
                              budget_bytes=int(_VMEM_LIMIT_BYTES * 0.45))
    else:
        tb = max(16 * p, (int(block_b) // (16 * p)) * (16 * p))
    rows_per_step = min(tb // p, n_rows)     # full-dim block if the batch is small
    grid = (pl.cdiv(n_rows, rows_per_step),)

    flops = 2 * pB * p * (n_in * n_hidden + n_hidden * n_out)
    bytes_accessed = (xp.size * xp.dtype.itemsize
                      + n_rows * p * n_out * out_dtype.itemsize
                      + (w1p.size + w2p.size) * mm_dtype.itemsize
                      + (b1p.size + b2p.size) * 4)

    # TODO(synk): if profiling shows exposed DMA at small tiles, add
    # pipeline_mode=pl.Buffered(3) to the streamed x BlockSpec.
    out_p = pl.pallas_call(
        wnet_kernel,
        out_shape=jax.ShapeDtypeStruct((n_rows, p * n_out), out_dtype),
        grid=grid,
        in_specs=[
            pl.BlockSpec((rows_per_step, p * n_in), lambda i: (i, 0)),   # streamed
            pl.BlockSpec((p * n_in, p * n_hidden), lambda i: (0, 0)),    # resident
            pl.BlockSpec((1, p * n_hidden), lambda i: (0, 0)),           # resident
            pl.BlockSpec((p * n_hidden, p * n_out), lambda i: (0, 0)),   # resident
            pl.BlockSpec((1, p * n_out), lambda i: (0, 0)),              # resident
        ],
        out_specs=pl.BlockSpec((rows_per_step, p * n_out), lambda i: (i, 0)),
        compiler_params=pltpu.CompilerParams(
            dimension_semantics=("parallel",),        # megacore-shard the batch
            vmem_limit_bytes=_VMEM_LIMIT_BYTES),
        cost_estimate=pl.CostEstimate(flops=flops, transcendentals=pB * n_out,
                                      bytes_accessed=bytes_accessed),
    )(xp, w1p, b1p, w2p, b2p)

    out = out_p.reshape(pB, n_out)            # free un-packing back to row-major
    return out[:B] if pB != B else out


# ---------------------------------------------------------------------------
# Reference / init (mirrors the PyTorch module)
# ---------------------------------------------------------------------------
def init_params(key, n_in, n_hidden, n_out):
    """nn.Linear-style init, U(-1/sqrt(fan_in), 1/sqrt(fan_in)); weights stored
    pre-transposed vs. PyTorch (W1:[In,H], W2:[H,O])."""
    k1, k2, k3, k4 = jax.random.split(key, 4)
    bound1 = 1.0 / math.sqrt(n_in)
    bound2 = 1.0 / math.sqrt(n_hidden)
    w1 = jax.random.uniform(k1, (n_in, n_hidden), jnp.float32, -bound1, bound1)
    b1 = jax.random.uniform(k2, (1, n_hidden), jnp.float32, -bound1, bound1)
    w2 = jax.random.uniform(k3, (n_hidden, n_out), jnp.float32, -bound2, bound2)
    b2 = jax.random.uniform(k4, (1, n_out), jnp.float32, -bound2, bound2)
    return w1, b1, w2, b2


def reference_forward(x, w1, b1, w2, b2):
    h = jnp.maximum(x @ w1 + b1, 0.0)
    return jax.nn.sigmoid(h @ w2 + b2)


if __name__ == "__main__":
    key = jax.random.PRNGKey(0)
    kp, kx1, kx2 = jax.random.split(key, 3)

    n_in, n_hidden, n_out = 16, 32, 8
    w1, b1, w2, b2 = init_params(kp, n_in, n_hidden, n_out)

    # --- small-shape check (module demo shapes): f32 MXU operands, tight tol ---
    B = 8
    x = jax.random.normal(kx1, (B, n_in), jnp.float32)
    ref = reference_forward(x, w1, b1, w2, b2)
    out_f32 = jax.block_until_ready(
        wnet_forward(x, w1, b1, w2, b2, matmul_dtype=jnp.float32))
    assert out_f32.shape == (B, n_out) and out_f32.dtype == jnp.float32
    assert jnp.allclose(out_f32, ref, atol=1e-4, rtol=1e-4), "f32 mismatch"

    # bf16 MXU operands with f32 accumulation (production path): relaxed tol.
    out_bf = jax.block_until_ready(wnet_forward(x, w1, b1, w2, b2))
    assert jnp.allclose(out_bf, ref, atol=2e-2, rtol=2e-2), "bf16 mismatch"

    # --- ragged larger batch with a small explicit tile: exercises multi-step
    #     grid, partial edge blocks, the <=p-1 row pad path and bf16 writeback.
    B2 = 1000
    x2 = jax.random.normal(kx2, (B2, n_in), jnp.float32)
    ref2 = reference_forward(x2, w1, b1, w2, b2)
    out2 = jax.block_until_ready(
        wnet_forward(x2, w1, b1, w2, b2, out_dtype=jnp.bfloat16, block_b=256))
    assert out2.shape == (B2, n_out) and out2.dtype == jnp.bfloat16
    assert jnp.allclose(out2.astype(jnp.float32), ref2, atol=3e-2, rtol=3e-2), \
        "tiled/bf16-out mismatch"

    print("KERNEL_OK")
</pallas_src>

<mosaic_0001>
module attributes {stable_mosaic.version = 11 : i64} {
  func.func @wnet_kernel(%arg0: i32, %arg1: memref<1x256xf32, #tpu.memory_space<vmem>>, %arg2: memref<256x512xf32, #tpu.memory_space<vmem>>, %arg3: memref<1x512xf32, #tpu.memory_space<vmem>>, %arg4: memref<512x128xf32, #tpu.memory_space<vmem>>, %arg5: memref<1x128xf32, #tpu.memory_space<vmem>>, %arg6: memref<1x128xf32, #tpu.memory_space<vmem>>) attributes {dimension_semantics = [#tpu.dimension_semantics<parallel>], iteration_bounds = array<i64: 1>, scalar_prefetch = 0 : i64, scratch_operands = 0 : i64, tpu.core_type = #tpu.core_type<tc>, window_params = [{transform_indices = @transform_0, window_bounds = array<i64: 1, 256>}, {pipeline_mode = #tpu.pipeline_mode<synchronous>, transform_indices = @transform_1, window_bounds = array<i64: 256, 512>}, {pipeline_mode = #tpu.pipeline_mode<synchronous>, transform_indices = @transform_2, window_bounds = array<i64: 1, 512>}, {pipeline_mode = #tpu.pipeline_mode<synchronous>, transform_indices = @transform_3, window_bounds = array<i64: 512, 128>}, {pipeline_mode = #tpu.pipeline_mode<synchronous>, transform_indices = @transform_4, window_bounds = array<i64: 1, 128>}, {transform_indices = @transform_5, window_bounds = array<i64: 1, 128>}]} {
    %c0 = arith.constant 0 : index
    %c0_0 = arith.constant 0 : index
    %0 = vector.load %arg1[%c0, %c0_0] : memref<1x256xf32, #tpu.memory_space<vmem>>, vector<1x256xf32>
    %c0_1 = arith.constant 0 : index
    %c0_2 = arith.constant 0 : index
    %1 = vector.load %arg2[%c0_1, %c0_2] : memref<256x512xf32, #tpu.memory_space<vmem>>, vector<256x512xf32>
    %cst = arith.constant dense<0.000000e+00> : vector<1x512xf32>
    %2 = tpu.matmul %0, %1, %cst {dimension_numbers = #tpu.dot_dimension_numbers<[1], [0], [0], [1], [0, 0, 1, 1], [], []>} : vector<1x256xf32>, vector<256x512xf32>, vector<1x512xf32> -> vector<1x512xf32>
    %c0_3 = arith.constant 0 : index
    %c0_4 = arith.constant 0 : index
    %3 = vector.load %arg3[%c0_3, %c0_4] : memref<1x512xf32, #tpu.memory_space<vmem>>, vector<1x512xf32>
    %4 = arith.addf %2, %3 : vector<1x512xf32>
    %cst_5 = arith.constant 0.000000e+00 : f32
    %5 = vector.broadcast %cst_5 : f32 to vector<1x512xf32>
    %6 = arith.maximumf %4, %5 : vector<1x512xf32>
    %c0_6 = arith.constant 0 : index
    %c0_7 = arith.constant 0 : index
    %7 = vector.load %arg4[%c0_6, %c0_7] : memref<512x128xf32, #tpu.memory_space<vmem>>, vector<512x128xf32>
    %cst_8 = arith.constant dense<0.000000e+00> : vector<1x128xf32>
    %8 = tpu.matmul %6, %7, %cst_8 {dimension_numbers = #tpu.dot_dimension_numbers<[1], [0], [0], [1], [0, 0, 1, 1], [], []>} : vector<1x512xf32>, vector<512x128xf32>, vector<1x128xf32> -> vector<1x128xf32>
    %c0_9 = arith.constant 0 : index
    %c0_10 = arith.constant 0 : index
    %9 = vector.load %arg5[%c0_9, %c0_10] : memref<1x128xf32, #tpu.memory_space<vmem>>, vector<1x128xf32>
    %10 = arith.addf %8, %9 : vector<1x128xf32>
    %11 = arith.negf %10 : vector<1x128xf32>
    %12 = math.exp %11 : vector<1x128xf32>
    %cst_11 = arith.constant 1.000000e+00 : f32
    %13 = vector.broadcast %cst_11 : f32 to vector<1x128xf32>
    %14 = arith.addf %13, %12 : vector<1x128xf32>
    %15 = arith.divf %13, %14 : vector<1x128xf32>
    %c0_12 = arith.constant 0 : index
    %c0_13 = arith.constant 0 : index
    %16 = vector.load %arg6[%c0_12, %c0_13] : memref<1x128xf32, #tpu.memory_space<vmem>>, vector<1x128xf32>
    tpu.vector_store %arg6[%c0_12, %c0_13], %15 {strides = array<i32>} : memref<1x128xf32, #tpu.memory_space<vmem>>, vector<1x128xf32>,
    return
  }
  func.func @transform_0(%arg0: i32) -> (i32, i32) {
    %c0_i32 = arith.constant 0 : i32
    %c0_i32_0 = arith.constant 0 : i32
    return %arg0, %c0_i32 : i32, i32
  }
  func.func @transform_1(%arg0: i32) -> (i32, i32) {
    %c0_i32 = arith.constant 0 : i32
    %c0_i32_0 = arith.constant 0 : i32
    %c0_i32_1 = arith.constant 0 : i32
    return %c0_i32, %c0_i32_0 : i32, i32
  }
  func.func @transform_2(%arg0: i32) -> (i32, i32) {
    %c0_i32 = arith.constant 0 : i32
    %c0_i32_0 = arith.constant 0 : i32
    %c0_i32_1 = arith.constant 0 : i32
    return %c0_i32, %c0_i32_0 : i32, i32
  }
  func.func @transform_3(%arg0: i32) -> (i32, i32) {
    %c0_i32 = arith.constant 0 : i32
    %c0_i32_0 = arith.constant 0 : i32
    %c0_i32_1 = arith.constant 0 : i32
    return %c0_i32, %c0_i32_0 : i32, i32
  }
  func.func @transform_4(%arg0: i32) -> (i32, i32) {
    %c0_i32 = arith.constant 0 : i32
    %c0_i32_0 = arith.constant 0 : i32
    %c0_i32_1 = arith.constant 0 : i32
    return %c0_i32, %c0_i32_0 : i32, i32
  }
  func.func @transform_5(%arg0: i32) -> (i32, i32) {
    %c0_i32 = arith.constant 0 : i32
    %c0_i32_0 = arith.constant 0 : i32
    return %arg0, %c0_i32 : i32, i32
  }
}

</mosaic_0001>

<llo_original>
// kernel: tpu_custom_call.1
$region0: #{tpu_custom_call.1}
  #allocation0 [shape = 'u32[]', space=smem, size = 0x4, offset = 0x4, fixed_abs, tag = 'smem constant byte address 0x4 - core index']
  #allocation1 [shape = 'u32[72,128]{1,0:T(1,128)}', space=vmem, size = 0x9000, scoped, tag = 'internal scratch']
  %s0 = inlined_call_operand.hbm [shape: f32[1,256], index: 0, kind: input, shape index: {}]
  %s1 = inlined_call_operand.hbm [shape: f32[256,512], index: 1, kind: input, shape index: {}]
  %s2 = inlined_call_operand.hbm [shape: f32[1,512], index: 2, kind: input, shape index: {}]
  %s3 = inlined_call_operand.hbm [shape: f32[512,128], index: 3, kind: input, shape index: {}]
  %s4 = inlined_call_operand.vmem [shape: f32[1,128], index: 4, kind: input, shape index: {}]
  %s5 = inlined_call_operand.hbm [shape: f32[1,128], index: 5, kind: output, shape index: {}]
  %s6 = sld [smem:[#allocation0]]
  $region46: #{tpu_custom_call.1} parent=0
    _
  %s8 = ssub.s32 1, %s6
  %s9 = scalar_select 0, %s8, %s6
  $region1: #{tpu_custom_call.1} parent=0
    #allocation2 [shape = 'u8[1024]{0}', space=vmem, size = 0x400, scoped, tag = 'input window, operand 0, single buffered']
    #allocation3 [shape = 's32[1]{0}', space=sflag, size = 0x4, scoped, tag = 'scoped memory for tpu_custom_call.1']
    #allocation4 [shape = 's32[1]{0}', space=sflag, size = 0x4, scoped, tag = 'scoped memory for tpu_custom_call.1']
    #allocation5 [shape = 'u8[524288]{0}', space=vmem, size = 0x80000, scoped, tag = 'input window, operand 1, single buffered']
    #allocation6 [shape = 's32[1]{0}', space=sflag, size = 0x4, scoped, tag = 'scoped memory for tpu_custom_call.1']
    #allocation7 [shape = 'u8[2048]{0}', space=vmem, size = 0x800, scoped, tag = 'input window, operand 2, single buffered']
    #allocation8 [shape = 'u8[262144]{0}', space=vmem, size = 0x40000, scoped, tag = 'input window, operand 3, single buffered']
    #allocation9 [shape = 's32[1]{0}', space=sflag, size = 0x4, scoped, tag = 'scoped memory for tpu_custom_call.1']
    #allocation10 [shape = 'u8[512]{0}', space=vmem, size = 0x400, scoped, tag = 'output window, operand 0, single buffered']
    %10 = vsyncpa [#allocation3], 0
    %11 = vsyncpa [#allocation6], 0
    %12 = vsyncpa [#allocation9], 0
    %13 = vsyncpa [#allocation4], 0
    // Predicated region
    $region2: #{tpu_custom_call.1} parent=1 // pred_check
      _
    $region3: #{tpu_custom_call.1} parent=1 // pred_check_branch
      %15 = sbr.rel (0) target = $region5
    $region4: #{tpu_custom_call.1} parent=1 // pred_region
      %17 = vsyncadd [#allocation3], 0
      %s19 = sshll.u32 %s0, 4
      %s20 = int_to_ptr.hbm [resolvable:$true] %s19
      %s21 = sshll.u32 [#allocation2], 4
      %s22 = int_to_ptr.vmem [resolvable:$true] %s21
      %24 = dma.hbm_to_vmem [thread:$0]  %s20, 32, %s22, [#allocation3]
    $region5: #{tpu_custom_call.1} parent=1 // pred_fallthru
      _
    // Predicated region
    $region6: #{tpu_custom_call.1} parent=1 // pred_check
      _
    $region7: #{tpu_custom_call.1} parent=1 // pred_check_branch
      %26 = sbr.rel (0) target = $region9
    $region8: #{tpu_custom_call.1} parent=1 // pred_region
      %28 = vsyncadd [#allocation6], 0
      %s29 = sshll.u32 %s1, 4
      %s30 = int_to_ptr.hbm [resolvable:$true] %s29
      %s31 = sshll.u32 [#allocation5], 4
      %s32 = int_to_ptr.vmem [resolvable:$true] %s31
      %37 = dma.hbm_to_vmem [thread:$0]  %s30, 16384, %s32, [#allocation6], 512, 512, 32
    $region9: #{tpu_custom_call.1} parent=1 // pred_fallthru
      _
    // Predicated region
    $region10: #{tpu_custom_call.1} parent=1 // pred_check
      _
    $region11: #{tpu_custom_call.1} parent=1 // pred_check_branch
      %39 = sbr.rel (0) target = $region13
    $region12: #{tpu_custom_call.1} parent=1 // pred_region
      %41 = vsyncadd [#allocation6], 0
      %s43 = sshll.u32 %s2, 4
      %s44 = int_to_ptr.hbm [resolvable:$true] %s43
      %s45 = sshll.u32 [#allocation7], 4
      %s46 = int_to_ptr.vmem [resolvable:$true] %s45
      %48 = dma.hbm_to_vmem [thread:$0]  %s44, 64, %s46, [#allocation6]
    $region13: #{tpu_custom_call.1} parent=1 // pred_fallthru
      _
    // Predicated region
    $region14: #{tpu_custom_call.1} parent=1 // pred_check
      _
    $region15: #{tpu_custom_call.1} parent=1 // pred_check_branch
      %50 = sbr.rel (0) target = $region17
    $region16: #{tpu_custom_call.1} parent=1 // pred_region
      %52 = vsyncadd [#allocation9], 0
      %s53 = sshll.u32 %s3, 4
      %s54 = int_to_ptr.hbm [resolvable:$true] %s53
      %s55 = sshll.u32 [#allocation8], 4
      %s56 = int_to_ptr.vmem [resolvable:$true] %s55
      %61 = dma.hbm_to_vmem [thread:$0]  %s54, 8192, %s56, [#allocation9], 128, 128, 8
    $region17: #{tpu_custom_call.1} parent=1 // pred_fallthru
      _
    // Predicated region
    $region18: #{tpu_custom_call.1} parent=1 // pred_check
      _
    $region19: #{tpu_custom_call.1} parent=1 // pred_check_branch
      %63 = sbr.rel (0) target = $region21
    $region20: #{tpu_custom_call.1} parent=1 // pred_region
      _
    $region21: #{tpu_custom_call.1} parent=1 // pred_fallthru
      _
    // Predicated region
    $region22: #{tpu_custom_call.1} parent=1 // pred_check
      _
    $region23: #{tpu_custom_call.1} parent=1 // pred_check_branch
      %65 = sbr.rel (0) target = $region25
    $region24: #{tpu_custom_call.1} parent=1 // pred_region
      %67 = dma.done [#allocation3], 32
    $region25: #{tpu_custom_call.1} parent=1 // pred_fallthru
      _
    // Predicated region
    $region26: #{tpu_custom_call.1} parent=1 // pred_check
      _
    $region27: #{tpu_custom_call.1} parent=1 // pred_check_branch
      %69 = sbr.rel (0) target = $region29
    $region28: #{tpu_custom_call.1} parent=1 // pred_region
      %71 = dma.done [#allocation6], 16384
    $region29: #{tpu_custom_call.1} parent=1 // pred_fallthru
      _
    // Predicated region
    $region30: #{tpu_custom_call.1} parent=1 // pred_check
      _
    $region31: #{tpu_custom_call.1} parent=1 // pred_check_branch
      %73 = sbr.rel (0) target = $region33
    $region32: #{tpu_custom_call.1} parent=1 // pred_region
      %75 = dma.done [#allocation6], 64
    $region33: #{tpu_custom_call.1} parent=1 // pred_fallthru
      _
    // Predicated region
    $region34: #{tpu_custom_call.1} parent=1 // pred_check
      _
    $region35: #{tpu_custom_call.1} parent=1 // pred_check_branch
      %77 = sbr.rel (0) target = $region37
    $region36: #{tpu_custom_call.1} parent=1 // pred_region
      %79 = dma.done [#allocation9], 8192
    $region37: #{tpu_custom_call.1} parent=1 // pred_fallthru
      _
    %v80 = vld [vmem:[#allocation2] sm:$0x3]
    %v81 = vld [vmem:[#allocation5] sm:$0xff]
    %v82 = vld [vmem:[#allocation5 + $0x8] sm:$0xff]
    %v83 = vld [vmem:[#allocation5 + $0x10] sm:$0xff]
    %v84 = vld [vmem:[#allocation5 + $0x18] sm:$0xff]
    %v85 = vld [vmem:[#allocation5 + $0x20] sm:$0xff]
    %v86 = vld [vmem:[#allocation5 + $0x28] sm:$0xff]
    %v87 = vld [vmem:[#allocation5 + $0x30] sm:$0xff]
    %v88 = vld [vmem:[#allocation5 + $0x38] sm:$0xff]
    %v89 = vld [vmem:[#allocation5 + $0x40] sm:$0xff]
    %v90 = vld [vmem:[#allocation5 + $0x48] sm:$0xff]
    %v91 = vld [vmem:[#allocation5 + $0x50] sm:$0xff]
    %v92 = vld [vmem:[#allocation5 + $0x58] sm:$0xff]
    %v93 = vld [vmem:[#allocation5 + $0x60] sm:$0xff]
    %v94 = vld [vmem:[#allocation5 + $0x68] sm:$0xff]
    %v95 = vld [vmem:[#allocation5 + $0x70] sm:$0xff]
    %v96 = vld [vmem:[#allocation5 + $0x78] sm:$0xff]
    %v97 = vld [vmem:[#allocation5 + $0x80] sm:$0xff]
    %v98 = vld [vmem:[#allocation5 + $0x88] sm:$0xff]
    %v99 = vld [vmem:[#allocation5 + $0x90] sm:$0xff]
    %v100 = vld [vmem:[#allocation5 + $0x98] sm:$0xff]
    %v101 = vld [vmem:[#allocation5 + $0xa0] sm:$0xff]
    %v102 = vld [vmem:[#allocation5 + $0xa8] sm:$0xff]
    %v103 = vld [vmem:[#allocation5 + $0xb0] sm:$0xff]
    %v104 = vld [vmem:[#allocation5 + $0xb8] sm:$0xff]
    %v105 = vld [vmem:[#allocation5 + $0xc0] sm:$0xff]
    %v106 = vld [vmem:[#allocation5 + $0xc8] sm:$0xff]
    %v107 = vld [vmem:[#allocation5 + $0xd0] sm:$0xff]
    %v108 = vld [vmem:[#allocation5 + $0xd8] sm:$0xff]
    %v109 = vld [vmem:[#allocation5 + $0xe0] sm:$0xff]
    %v110 = vld [vmem:[#allocation5 + $0xe8] sm:$0xff]
    %v111 = vld [vmem:[#allocation5 + $0xf0] sm:$0xff]
    %v112 = vld [vmem:[#allocation5 + $0xf8] sm:$0xff]
    %v113 = vld [vmem:[#allocation5 + $0x100] sm:$0xff]
    %v114 = vld [vmem:[#allocation5 + $0x108] sm:$0xff]
    %v115 = vld [vmem:[#allocation5 + $0x110] sm:$0xff]
    %v116 = vld [vmem:[#allocation5 + $0x118] sm:$0xff]
    %v117 = vld [vmem:[#allocation5 + $0x120] sm:$0xff]
    %v118 = vld [vmem:[#allocation5 + $0x128] sm:$0xff]
    %v119 = vld [vmem:[#allocation5 + $0x130] sm:$0xff]
    %v120 = vld [vmem:[#allocation5 + $0x138] sm:$0xff]
    %v121 = vld [vmem:[#allocation5 + $0x140] sm:$0xff]
    %v122 = vld [vmem:[#allocation5 + $0x148] sm:$0xff]
    %v123 = vld [vmem:[#allocation5 + $0x150] sm:$0xff]
    %v124 = vld [vmem:[#allocation5 + $0x158] sm:$0xff]
    %v125 = vld [vmem:[#allocation5 + $0x160] sm:$0xff]
    %v126 = vld [vmem:[#allocation5 + $0x168] sm:$0xff]
    %v127 = vld [vmem:[#allocation5 + $0x170] sm:$0xff]
    %v128 = vld [vmem:[#allocation5 + $0x178] sm:$0xff]
    %v129 = vld [vmem:[#allocation5 + $0x180] sm:$0xff]
    %v130 = vld [vmem:[#allocation5 + $0x188] sm:$0xff]
    %v131 = vld [vmem:[#allocation5 + $0x190] sm:$0xff]
    %v132 = vld [vmem:[#allocation5 + $0x198] sm:$0xff]
    %v133 = vld [vmem:[#allocation5 + $0x1a0] sm:$0xff]
    %v134 = vld [vmem:[#allocation5 + $0x1a8] sm:$0xff]
    %v135 = vld [vmem:[#allocation5 + $0x1b0] sm:$0xff]
    %v136 = vld [vmem:[#allocation5 + $0x1b8] sm:$0xff]
    %v137 = vld [vmem:[#allocation5 + $0x1c0] sm:$0xff]
    %v138 = vld [vmem:[#allocation5 + $0x1c8] sm:$0xff]
    %v139 = vld [vmem:[#allocation5 + $0x1d0] sm:$0xff]
    %v140 = vld [vmem:[#allocation5 + $0x1d8] sm:$0xff]
    %v141 = vld [vmem:[#allocation5 + $0x1e0] sm:$0xff]
    %v142 = vld [vmem:[#allocation5 + $0x1e8] sm:$0xff]
    %v143 = vld [vmem:[#allocation5 + $0x1f0] sm:$0xff]
    %v144 = vld [vmem:[#allocation5 + $0x1f8] sm:$0xff]
    %v145 = vld [vmem:[#allocation5 + $0x200] sm:$0xff]
    %v146 = vld [vmem:[#allocation5 + $0x208] sm:$0xff]
    %v147 = vld [vmem:[#allocation5 + $0x210] sm:$0xff]
    %v148 = vld [vmem:[#allocation5 + $0x218] sm:$0xff]
    %v149 = vld [vmem:[#allocation5 + $0x220] sm:$0xff]
    %v150 = vld [vmem:[#allocation5 + $0x228] sm:$0xff]
    %v151 = vld [vmem:[#allocation5 + $0x230] sm:$0xff]
    %v152 = vld [vmem:[#allocation5 + $0x238] sm:$0xff]
    %v153 = vld [vmem:[#allocation5 + $0x240] sm:$0xff]
    %v154 = vld [vmem:[#allocation5 + $0x248] sm:$0xff]
    %v155 = vld [vmem:[#allocation5 + $0x250] sm:$0xff]
    %v156 = vld [vmem:[#allocation5 + $0x258] sm:$0xff]
    %v157 = vld [vmem:[#allocation5 + $0x260] sm:$0xff]
    %v158 = vld [vmem:[#allocation5 + $0x268] sm:$0xff]
    %v159 = vld [vmem:[#allocation5 + $0x270] sm:$0xff]
    %v160 = vld [vmem:[#allocation5 + $0x278] sm:$0xff]
    %v161 = vld [vmem:[#allocation5 + $0x280] sm:$0xff]
    %v162 = vld [vmem:[#allocation5 + $0x288] sm:$0xff]
    %v163 = vld [vmem:[#allocation5 + $0x290] sm:$0xff]
    %v164 = vld [vmem:[#allocation5 + $0x298] sm:$0xff]
    %v165 = vld [vmem:[#allocation5 + $0x2a0] sm:$0xff]
    %v166 = vld [vmem:[#allocation5 + $0x2a8] sm:$0xff]
    %v167 = vld [vmem:[#allocation5 + $0x2b0] sm:$0xff]
    %v168 = vld [vmem:[#allocation5 + $0x2b8] sm:$0xff]
    %v169 = vld [vmem:[#allocation5 + $0x2c0] sm:$0xff]
    %v170 = vld [vmem:[#allocation5 + $0x2c8] sm:$0xff]
    %v171 = vld [vmem:[#allocation5 + $0x2d0] sm:$0xff]
    %v172 = vld [vmem:[#allocation5 + $0x2d8] sm:$0xff]
    %v173 = vld [vmem:[#allocation5 + $0x2e0] sm:$0xff]
    %v174 = vld [vmem:[#allocation5 + $0x2e8] sm:$0xff]
    %v175 = vld [vmem:[#allocation5 + $0x2f0] sm:$0xff]
    %v176 = vld [vmem:[#allocation5 + $0x2f8] sm:$0xff]
    %v177 = vld [vmem:[#allocation5 + $0x300] sm:$0xff]
    %v178 = vld [vmem:[#allocation5 + $0x308] sm:$0xff]
    %v179 = vld [vmem:[#allocation5 + $0x310] sm:$0xff]
    %v180 = vld [vmem:[#allocation5 + $0x318] sm:$0xff]
    %v181 = vld [vmem:[#allocation5 + $0x320] sm:$0xff]
    %v182 = vld [vmem:[#allocation5 + $0x328] sm:$0xff]
    %v183 = vld [vmem:[#allocation5 + $0x330] sm:$0xff]
    %v184 = vld [vmem:[#allocation5 + $0x338] sm:$0xff]
    %v185 = vld [vmem:[#allocation5 + $0x340] sm:$0xff]
    %v186 = vld [vmem:[#allocation5 + $0x348] sm:$0xff]
    %v187 = vld [vmem:[#allocation5 + $0x350] sm:$0xff]
    %v188 = vld [vmem:[#allocation5 + $0x358] sm:$0xff]
    %v189 = vld [vmem:[#allocation5 + $0x360] sm:$0xff]
    %v190 = vld [vmem:[#allocation5 + $0x368] sm:$0xff]
    %v191 = vld [vmem:[#allocation5 + $0x370] sm:$0xff]
    %v192 = vld [vmem:[#allocation5 + $0x378] sm:$0xff]
    %v193 = vld [vmem:[#allocation5 + $0x380] sm:$0xff]
    %v194 = vld [vmem:[#allocation5 + $0x388] sm:$0xff]
    %v195 = vld [vmem:[#allocation5 + $0x390] sm:$0xff]
    %v196 = vld [vmem:[#allocation5 + $0x398] sm:$0xff]
    %v197 = vld [vmem:[#allocation5 + $0x3a0] sm:$0xff]
    %v198 = vld [vmem:[#allocation5 + $0x3a8] sm:$0xff]
    %v199 = vld [vmem:[#allocation5 + $0x3b0] sm:$0xff]
    %v200 = vld [vmem:[#allocation5 + $0x3b8] sm:$0xff]
    %v201 = vld [vmem:[#allocation5 + $0x3c0] sm:$0xff]
    %v202 = vld [vmem:[#allocation5 + $0x3c8] sm:$0xff]
    %v203 = vld [vmem:[#allocation5 + $0x3d0] sm:$0xff]
    %v204 = vld [vmem:[#allocation5 + $0x3d8] sm:$0xff]
    %v205 = vld [vmem:[#allocation5 + $0x3e0] sm:$0xff]
    %v206 = vld [vmem:[#allocation5 + $0x3e8] sm:$0xff]
    %v207 = vld [vmem:[#allocation5 + $0x3f0] sm:$0xff]
    %v208 = vld [vmem:[#allocation5 + $0x3f8] sm:$0xff]
    %v209 = vld [vmem:[#allocation7] sm:$0xf]
    %v211 = vperm.slane %v80, 0
    %v212 = vperm.slane %v80, 1
    %v216 = vperm.slane %v209, 0
    %v217 = vperm.slane %v209, 1
    %v218 = vperm.slane %v209, 2
    %v219 = vperm.slane %v209, 3
    %224 = vmatpush.msra.mxu0 %v141
    %225 = vmatpush.msra.mxu0 %v137
    %226 = vmatpush.msra.mxu0 %v133
    %227 = vmatpush.msra.mxu0 %v129
    %228 = vmatpush.msra.mxu0 %v125
    %229 = vmatpush.msra.mxu0 %v121
    %230 = vmatpush.msra.mxu0 %v117
    %231 = vmatpush.msra.mxu0 %v113
    %232 = vmatpush.msra.mxu0 %v109
    %233 = vmatpush.msra.mxu0 %v105
    %234 = vmatpush.msra.mxu0 %v101
    %235 = vmatpush.msra.mxu0 %v97
    %236 = vmatpush.msra.mxu0 %v93
    %237 = vmatpush.msra.mxu0 %v89
    %238 = vmatpush.msra.mxu0 %v85
    %239 = vmatpush.msra.mxu0 %v81
    %240 = vmatmul.f32.gmra.mxu0 %v211
    %v241 = vpop.f32.mrf.mxu0
    %v242 = vadd.f32 %v216, %v241
    %243 = vdwg.mxu0
    %244 = vmatpush.msra.mxu0 %v205
    %245 = vmatpush.msra.mxu0 %v201
    %246 = vmatpush.msra.mxu0 %v197
    %247 = vmatpush.msra.mxu0 %v193
    %248 = vmatpush.msra.mxu0 %v189
    %249 = vmatpush.msra.mxu0 %v185
    %250 = vmatpush.msra.mxu0 %v181
    %251 = vmatpush.msra.mxu0 %v177
    %252 = vmatpush.msra.mxu0 %v173
    %253 = vmatpush.msra.mxu0 %v169
    %254 = vmatpush.msra.mxu0 %v165
    %255 = vmatpush.msra.mxu0 %v161
    %256 = vmatpush.msra.mxu0 %v157
    %257 = vmatpush.msra.mxu0 %v153
    %258 = vmatpush.msra.mxu0 %v149
    %259 = vmatpush.msra.mxu0 %v145
    %260 = vmatmul.f32.gmra.mxu0 %v212
    %v261 = vpop.f32.mrf.mxu0
    %v262 = vadd.f32 %v242, %v261
    %263 = vdwg.mxu0
    %264 = vmatpush.msra.mxu0 %v142
    %265 = vmatpush.msra.mxu0 %v138
    %266 = vmatpush.msra.mxu0 %v134
    %267 = vmatpush.msra.mxu0 %v130
    %268 = vmatpush.msra.mxu0 %v126
    %269 = vmatpush.msra.mxu0 %v122
    %270 = vmatpush.msra.mxu0 %v118
    %271 = vmatpush.msra.mxu0 %v114
    %272 = vmatpush.msra.mxu0 %v110
    %273 = vmatpush.msra.mxu0 %v106
    %274 = vmatpush.msra.mxu0 %v102
    %275 = vmatpush.msra.mxu0 %v98
    %276 = vmatpush.msra.mxu0 %v94
    %277 = vmatpush.msra.mxu0 %v90
    %278 = vmatpush.msra.mxu0 %v86
    %279 = vmatpush.msra.mxu0 %v82
    %280 = vmatmul.f32.gmra.mxu0 %v211
    %v281 = vpop.f32.mrf.mxu0
    %v282 = vadd.f32 %v217, %v281
    %283 = vdwg.mxu0
    %284 = vmatpush.msra.mxu0 %v206
    %285 = vmatpush.msra.mxu0 %v202
    %286 = vmatpush.msra.mxu0 %v198
    %287 = vmatpush.msra.mxu0 %v194
    %288 = vmatpush.msra.mxu0 %v190
    %289 = vmatpush.msra.mxu0 %v186
    %290 = vmatpush.msra.mxu0 %v182
    %291 = vmatpush.msra.mxu0 %v178
    %292 = vmatpush.msra.mxu0 %v174
    %293 = vmatpush.msra.mxu0 %v170
    %294 = vmatpush.msra.mxu0 %v166
    %295 = vmatpush.msra.mxu0 %v162
    %296 = vmatpush.msra.mxu0 %v158
    %297 = vmatpush.msra.mxu0 %v154
    %298 = vmatpush.msra.mxu0 %v150
    %299 = vmatpush.msra.mxu0 %v146
    %300 = vmatmul.f32.gmra.mxu0 %v212
    %v301 = vpop.f32.mrf.mxu0
    %v302 = vadd.f32 %v282, %v301
    %303 = vdwg.mxu0
    %304 = vmatpush.msra.mxu0 %v143
    %305 = vmatpush.msra.mxu0 %v139
    %306 = vmatpush.msra.mxu0 %v135
    %307 = vmatpush.msra.mxu0 %v131
    %308 = vmatpush.msra.mxu0 %v127
    %309 = vmatpush.msra.mxu0 %v123
    %310 = vmatpush.msra.mxu0 %v119
    %311 = vmatpush.msra.mxu0 %v115
    %312 = vmatpush.msra.mxu0 %v111
    %313 = vmatpush.msra.mxu0 %v107
    %314 = vmatpush.msra.mxu0 %v103
    %315 = vmatpush.msra.mxu0 %v99
    %316 = vmatpush.msra.mxu0 %v95
    %317 = vmatpush.msra.mxu0 %v91
    %318 = vmatpush.msra.mxu0 %v87
    %319 = vmatpush.msra.mxu0 %v83
    %320 = vmatmul.f32.gmra.mxu0 %v211
    %v321 = vpop.f32.mrf.mxu0
    %v322 = vadd.f32 %v218, %v321
    %323 = vdwg.mxu0
    %324 = vmatpush.msra.mxu0 %v207
    %325 = vmatpush.msra.mxu0 %v203
    %326 = vmatpush.msra.mxu0 %v199
    %327 = vmatpush.msra.mxu0 %v195
    %328 = vmatpush.msra.mxu0 %v191
    %329 = vmatpush.msra.mxu0 %v187
    %330 = vmatpush.msra.mxu0 %v183
    %331 = vmatpush.msra.mxu0 %v179
    %332 = vmatpush.msra.mxu0 %v175
    %333 = vmatpush.msra.mxu0 %v171
    %334 = vmatpush.msra.mxu0 %v167
    %335 = vmatpush.msra.mxu0 %v163
    %336 = vmatpush.msra.mxu0 %v159
    %337 = vmatpush.msra.mxu0 %v155
    %338 = vmatpush.msra.mxu0 %v151
    %339 = vmatpush.msra.mxu0 %v147
    %340 = vmatmul.f32.gmra.mxu0 %v212
    %v341 = vpop.f32.mrf.mxu0
    %v342 = vadd.f32 %v322, %v341
    %343 = vdwg.mxu0
    %344 = vmatpush.msra.mxu0 %v144
    %345 = vmatpush.msra.mxu0 %v140
    %346 = vmatpush.msra.mxu0 %v136
    %347 = vmatpush.msra.mxu0 %v132
    %348 = vmatpush.msra.mxu0 %v128
    %349 = vmatpush.msra.mxu0 %v124
    %350 = vmatpush.msra.mxu0 %v120
    %351 = vmatpush.msra.mxu0 %v116
    %352 = vmatpush.msra.mxu0 %v112
    %353 = vmatpush.msra.mxu0 %v108
    %354 = vmatpush.msra.mxu0 %v104
    %355 = vmatpush.msra.mxu0 %v100
    %356 = vmatpush.msra.mxu0 %v96
    %357 = vmatpush.msra.mxu0 %v92
    %358 = vmatpush.msra.mxu0 %v88
    %359 = vmatpush.msra.mxu0 %v84
    %360 = vmatmul.f32.gmra.mxu0 %v211
    %v361 = vpop.f32.mrf.mxu0
    %v362 = vadd.f32 %v219, %v361
    %363 = vdwg.mxu0
    %364 = vmatpush.msra.mxu0 %v208
    %365 = vmatpush.msra.mxu0 %v204
    %366 = vmatpush.msra.mxu0 %v200
    %367 = vmatpush.msra.mxu0 %v196
    %368 = vmatpush.msra.mxu0 %v192
    %369 = vmatpush.msra.mxu0 %v188
    %370 = vmatpush.msra.mxu0 %v184
    %371 = vmatpush.msra.mxu0 %v180
    %372 = vmatpush.msra.mxu0 %v176
    %373 = vmatpush.msra.mxu0 %v172
    %374 = vmatpush.msra.mxu0 %v168
    %375 = vmatpush.msra.mxu0 %v164
    %376 = vmatpush.msra.mxu0 %v160
    %377 = vmatpush.msra.mxu0 %v156
    %378 = vmatpush.msra.mxu0 %v152
    %379 = vmatpush.msra.mxu0 %v148
    %380 = vmatmul.f32.gmra.mxu0 %v212
    %v381 = vpop.f32.mrf.mxu0
    %v382 = vadd.f32 %v362, %v381
    %383 = vdwg.mxu0
    %v384 = vmax.f32 %v262, 0.0
    %v385 = vmax.f32 %v302, 0.0
    %v386 = vmax.f32 %v342, 0.0
    %v387 = vmax.f32 %v382, 0.0
    %v388 = vld [vmem:[#allocation8] sm:$0xff]
    %v389 = vld [vmem:[#allocation8 + $0x8] sm:$0xff]
    %v390 = vld [vmem:[#allocation8 + $0x10] sm:$0xff]
    %v391 = vld [vmem:[#allocation8 + $0x18] sm:$0xff]
    %v392 = vld [vmem:[#allocation8 + $0x20] sm:$0xff]
    %v393 = vld [vmem:[#allocation8 + $0x28] sm:$0xff]
    %v394 = vld [vmem:[#allocation8 + $0x30] sm:$0xff]
    %v395 = vld [vmem:[#allocation8 + $0x38] sm:$0xff]
    %v396 = vld [vmem:[#allocation8 + $0x40] sm:$0xff]
    %v397 = vld [vmem:[#allocation8 + $0x48] sm:$0xff]
    %v398 = vld [vmem:[#allocation8 + $0x50] sm:$0xff]
    %v399 = vld [vmem:[#allocation8 + $0x58] sm:$0xff]
    %v400 = vld [vmem:[#allocation8 + $0x60] sm:$0xff]
    %v401 = vld [vmem:[#allocation8 + $0x68] sm:$0xff]
    %v402 = vld [vmem:[#allocation8 + $0x70] sm:$0xff]
    %v403 = vld [vmem:[#allocation8 + $0x78] sm:$0xff]
    %v404 = vld [vmem:[#allocation8 + $0x80] sm:$0xff]
    %v405 = vld [vmem:[#allocation8 + $0x88] sm:$0xff]
    %v406 = vld [vmem:[#allocation8 + $0x90] sm:$0xff]
    %v407 = vld [vmem:[#allocation8 + $0x98] sm:$0xff]
    %v408 = vld [vmem:[#allocation8 + $0xa0] sm:$0xff]
    %v409 = vld [vmem:[#allocation8 + $0xa8] sm:$0xff]
    %v410 = vld [vmem:[#allocation8 + $0xb0] sm:$0xff]
    %v411 = vld [vmem:[#allocation8 + $0xb8] sm:$0xff]
    %v412 = vld [vmem:[#allocation8 + $0xc0] sm:$0xff]
    %v413 = vld [vmem:[#allocation8 + $0xc8] sm:$0xff]
    %v414 = vld [vmem:[#allocation8 + $0xd0] sm:$0xff]
    %v415 = vld [vmem:[#allocation8 + $0xd8] sm:$0xff]
    %v416 = vld [vmem:[#allocation8 + $0xe0] sm:$0xff]
    %v417 = vld [vmem:[#allocation8 + $0xe8] sm:$0xff]
    %v418 = vld [vmem:[#allocation8 + $0xf0] sm:$0xff]
    %v419 = vld [vmem:[#allocation8 + $0xf8] sm:$0xff]
    %v420 = vld [vmem:[#allocation8 + $0x100] sm:$0xff]
    %v421 = vld [vmem:[#allocation8 + $0x108] sm:$0xff]
    %v422 = vld [vmem:[#allocation8 + $0x110] sm:$0xff]
    %v423 = vld [vmem:[#allocation8 + $0x118] sm:$0xff]
    %v424 = vld [vmem:[#allocation8 + $0x120] sm:$0xff]
    %v425 = vld [vmem:[#allocation8 + $0x128] sm:$0xff]
    %v426 = vld [vmem:[#allocation8 + $0x130] sm:$0xff]
    %v427 = vld [vmem:[#allocation8 + $0x138] sm:$0xff]
    %v428 = vld [vmem:[#allocation8 + $0x140] sm:$0xff]
    %v429 = vld [vmem:[#allocation8 + $0x148] sm:$0xff]
    %v430 = vld [vmem:[#allocation8 + $0x150] sm:$0xff]
    %v431 = vld [vmem:[#allocation8 + $0x158] sm:$0xff]
    %v432 = vld [vmem:[#allocation8 + $0x160] sm:$0xff]
    %v433 = vld [vmem:[#allocation8 + $0x168] sm:$0xff]
    %v434 = vld [vmem:[#allocation8 + $0x170] sm:$0xff]
    %v435 = vld [vmem:[#allocation8 + $0x178] sm:$0xff]
    %v436 = vld [vmem:[#allocation8 + $0x180] sm:$0xff]
    %v437 = vld [vmem:[#allocation8 + $0x188] sm:$0xff]
    %v438 = vld [vmem:[#allocation8 + $0x190] sm:$0xff]
    %v439 = vld [vmem:[#allocation8 + $0x198] sm:$0xff]
    %v440 = vld [vmem:[#allocation8 + $0x1a0] sm:$0xff]
    %v441 = vld [vmem:[#allocation8 + $0x1a8] sm:$0xff]
    %v442 = vld [vmem:[#allocation8 + $0x1b0] sm:$0xff]
    %v443 = vld [vmem:[#allocation8 + $0x1b8] sm:$0xff]
    %v444 = vld [vmem:[#allocation8 + $0x1c0] sm:$0xff]
    %v445 = vld [vmem:[#allocation8 + $0x1c8] sm:$0xff]
    %v446 = vld [vmem:[#allocation8 + $0x1d0] sm:$0xff]
    %v447 = vld [vmem:[#allocation8 + $0x1d8] sm:$0xff]
    %v448 = vld [vmem:[#allocation8 + $0x1e0] sm:$0xff]
    %v449 = vld [vmem:[#allocation8 + $0x1e8] sm:$0xff]
    %v450 = vld [vmem:[#allocation8 + $0x1f0] sm:$0xff]
    %v451 = vld [vmem:[#allocation8 + $0x1f8] sm:$0xff]
    %v452 = vld [vmem:[%s4] sm:$0x1]
    %453 = vmatpush.msra.mxu0 %v403
    %454 = vmatpush.msra.mxu0 %v402
    %455 = vmatpush.msra.mxu0 %v401
    %456 = vmatpush.msra.mxu0 %v400
    %457 = vmatpush.msra.mxu0 %v399
    %458 = vmatpush.msra.mxu0 %v398
    %459 = vmatpush.msra.mxu0 %v397
    %460 = vmatpush.msra.mxu0 %v396
    %461 = vmatpush.msra.mxu0 %v395
    %462 = vmatpush.msra.mxu0 %v394
    %463 = vmatpush.msra.mxu0 %v393
    %464 = vmatpush.msra.mxu0 %v392
    %465 = vmatpush.msra.mxu0 %v391
    %466 = vmatpush.msra.mxu0 %v390
    %467 = vmatpush.msra.mxu0 %v389
    %468 = vmatpush.msra.mxu0 %v388
    %469 = vmatmul.f32.gmra.mxu0 %v384
    %v470 = vpop.f32.mrf.mxu0
    %v471 = vadd.f32 %v452, %v470
    %472 = vdwg.mxu0
    %473 = vmatpush.msra.mxu0 %v419
    %474 = vmatpush.msra.mxu0 %v418
    %475 = vmatpush.msra.mxu0 %v417
    %476 = vmatpush.msra.mxu0 %v416
    %477 = vmatpush.msra.mxu0 %v415
    %478 = vmatpush.msra.mxu0 %v414
    %479 = vmatpush.msra.mxu0 %v413
    %480 = vmatpush.msra.mxu0 %v412
    %481 = vmatpush.msra.mxu0 %v411
    %482 = vmatpush.msra.mxu0 %v410
    %483 = vmatpush.msra.mxu0 %v409
    %484 = vmatpush.msra.mxu0 %v408
    %485 = vmatpush.msra.mxu0 %v407
    %486 = vmatpush.msra.mxu0 %v406
    %487 = vmatpush.msra.mxu0 %v405
    %488 = vmatpush.msra.mxu0 %v404
    %489 = vmatmul.f32.gmra.mxu0 %v385
    %v490 = vpop.f32.mrf.mxu0
    %v491 = vadd.f32 %v471, %v490
    %492 = vdwg.mxu0
    %493 = vmatpush.msra.mxu0 %v435
    %494 = vmatpush.msra.mxu0 %v434
    %495 = vmatpush.msra.mxu0 %v433
    %496 = vmatpush.msra.mxu0 %v432
    %497 = vmatpush.msra.mxu0 %v431
    %498 = vmatpush.msra.mxu0 %v430
    %499 = vmatpush.msra.mxu0 %v429
    %500 = vmatpush.msra.mxu0 %v428
    %501 = vmatpush.msra.mxu0 %v427
    %502 = vmatpush.msra.mxu0 %v426
    %503 = vmatpush.msra.mxu0 %v425
    %504 = vmatpush.msra.mxu0 %v424
    %505 = vmatpush.msra.mxu0 %v423
    %506 = vmatpush.msra.mxu0 %v422
    %507 = vmatpush.msra.mxu0 %v421
    %508 = vmatpush.msra.mxu0 %v420
    %509 = vmatmul.f32.gmra.mxu0 %v386
    %v510 = vpop.f32.mrf.mxu0
    %v511 = vadd.f32 %v491, %v510
    %512 = vdwg.mxu0
    %513 = vmatpush.msra.mxu0 %v451
    %514 = vmatpush.msra.mxu0 %v450
    %515 = vmatpush.msra.mxu0 %v449
    %516 = vmatpush.msra.mxu0 %v448
    %517 = vmatpush.msra.mxu0 %v447
    %518 = vmatpush.msra.mxu0 %v446
    %519 = vmatpush.msra.mxu0 %v445
    %520 = vmatpush.msra.mxu0 %v444
    %521 = vmatpush.msra.mxu0 %v443
    %522 = vmatpush.msra.mxu0 %v442
    %523 = vmatpush.msra.mxu0 %v441
    %524 = vmatpush.msra.mxu0 %v440
    %525 = vmatpush.msra.mxu0 %v439
    %526 = vmatpush.msra.mxu0 %v438
    %527 = vmatpush.msra.mxu0 %v437
    %528 = vmatpush.msra.mxu0 %v436
    %529 = vmatmul.f32.gmra.mxu0 %v387
    %v530 = vpop.f32.mrf.mxu0
    %v531 = vadd.f32 %v511, %v530
    %532 = vdwg.mxu0
    %v533 = vxor.u32 %v531, 2147483648
    %v534 = vmul.f32 %v533, 1.442695
    %v535 = vpow.pop %v534
    %v536 = vadd.f32 %v535, 1.0
    %v537 = vrcp.pop %v536
    %v538 = vmul.f32 %v536, %v537
    %v539 = vsub.f32 1.0, %v538
    %v540 = vmul.f32 %v537, %v539
    %v541 = vadd.f32 %v537, %v540
    %vm542 = vweird.f32 %v536
    %vm543 = vweird.f32 %v537
    %vm544 = vmor %vm542, %vm543
    %v545 = vsel %vm544, %v537, %v541
    %v546 = vand.u32 2147483647, %v536
    %vm547 = vcmp.eq.f32.partialorder %v546, 8.507059e+37
    %v548 = vand.u32 %v536, 2147483648
    %v549 = vor.u32 1.1754944e-38, %v548
    %v550 = vsel %vm547, %v549, %v545
    %v551 = vmul.f32 1.0, %v550
    %552 = vst [vmem:[#allocation10] sm:$0x1] %v551
    // Predicated region
    $region38: #{tpu_custom_call.1} parent=1 // pred_check
      _
    $region39: #{tpu_custom_call.1} parent=1 // pred_check_branch
      %554 = sbr.rel (0) target = $region41
    $region40: #{tpu_custom_call.1} parent=1 // pred_region
      %556 = vsyncadd [#allocation4], 0
      %s558 = sshll.u32 [#allocation10], 4
      %s559 = int_to_ptr.vmem [resolvable:$true] %s558
      %s560 = sshll.u32 %s5, 4
      %s561 = int_to_ptr.hbm [resolvable:$true] %s560
      %563 = dma.vmem_to_hbm [thread:$0]  %s559, 16, %s561, [#allocation4]
    $region41: #{tpu_custom_call.1} parent=1 // pred_fallthru
      _
    // Predicated region
    $region42: #{tpu_custom_call.1} parent=1 // pred_check
      _
    $region43: #{tpu_custom_call.1} parent=1 // pred_check_branch
      %565 = sbr.rel (0) target = $region45
    $region44: #{tpu_custom_call.1} parent=1 // pred_region
      %567 = dma.done [#allocation4], 16
    $region45: #{tpu_custom_call.1} parent=1 // pred_fallthru
      _
    %568 = vsyncpa [#allocation3], 1
    %569 = vsyncpa [#allocation6], 1
    %570 = vsyncpa [#allocation9], 1
    %571 = vsyncpa [#allocation4], 1

</llo_original>
